<compile_context>
chip_gen: v7x
topology: tpu7x:2x2x1
jax: 0.10.0
libtpu: 0.0.40
codegen_flags: <defaults>
</compile_context>

<pallas_src>
import math

import jax
import jax.numpy as jnp
from jax.experimental import pallas as pl
from jax.experimental.pallas import tpu as pltpu

_PACK = 128                      # pixels packed per lane-dense output row
_ROW_ALIGN = 8                   # sublane alignment for row tiles
_MAX_ROW_TILE = 8192             # hard cap: 12 MiB/block for out_dim=3
_MIN_GRID_STEPS = 4              # floor so fill pipelines + v7x megacore shards
_MIN_ROWS_FOR_MULTISTEP = 64     # below this, per-step overhead dominates
_VMEM_BUDGET_BYTES = 28 * 1024 * 1024   # headroom under the 32 MiB scoped limit
_VMEM_LIMIT_BYTES = 32 * 1024 * 1024    # safe on v5e/v6e/v7x


# ----------------------------------------------------------------------------
# Parameter construction (mirrors BackgroundField.__init__ deterministically).
# ----------------------------------------------------------------------------
def make_bg_color(out_dim=3, bg_color="1.0,1.0,1.0", min_color=-1):
    if out_dim == 3:
        if isinstance(bg_color, str):
            bg = [float(b) for b in bg_color.split(",")]
        else:
            bg = [bg_color]
        if min_color == -1:
            bg = [b * 2 - 1 for b in bg]
        if len(bg) == 1:
            bg = bg + bg + bg
        bg = jnp.asarray(bg, dtype=jnp.float32)
    else:
        # TODO(synk): torch.ones(out_dim).uniform_() init replaced by a
        # deterministic jax.random substitute (not bit-identical to PyTorch).
        bg = jax.random.uniform(jax.random.PRNGKey(42), (out_dim,), dtype=jnp.float32)
        if min_color == -1:
            bg = bg * 2 - 1
    return bg


# ----------------------------------------------------------------------------
# Pallas kernel: sublane-broadcast the resident lane-dense pattern row across
# the output tile and store full-width (unmasked vst).
# ----------------------------------------------------------------------------
def _bg_tile_kernel(pat_ref, o_ref):
    # pat_ref: (1, out_dim*128) resident in VMEM; o_ref: (tm, out_dim*128).
    o_ref[...] = jnp.broadcast_to(pat_ref[...], o_ref.shape)


def _round_up(x, m):
    return -(-x // m) * m


def background_field_forward(x, bg_color, *, return_packed=False):
    """Equivalent of BackgroundField.forward(x): bg_color expanded over x[..., :-1]."""
    out_dim = int(bg_color.shape[0])
    lead_shape = x.shape[:-1]
    n_rows = int(math.prod(lead_shape)) if lead_shape else 1

    lane_width = out_dim * _PACK                 # multiple of 128 -> dense stores
    rows_packed = -(-n_rows // _PACK)            # ceil(n_rows / 128)

    # Lane-dense pattern row: 128 pixels' colors packed contiguously, so the
    # reshape (rows_packed, out_dim*128) -> (rows_packed*128, out_dim)
    # reproduces the per-pixel layout exactly.
    pattern = jnp.tile(bg_color.astype(jnp.float32), _PACK).reshape(1, lane_width)

    # ---- Tile / grid sizing -------------------------------------------------
    # Max rows per block such that 2 (double-buffered) output blocks fit the
    # VMEM budget; capped at _MAX_ROW_TILE (12 MiB/block for out_dim=3).
    bytes_per_row = lane_width * 4
    budget_rows = max(_ROW_ALIGN,
                      (_VMEM_BUDGET_BYTES // (2 * bytes_per_row)) // _ROW_ALIGN * _ROW_ALIGN)
    max_row_tile = min(_MAX_ROW_TILE, budget_rows)

    if rows_packed < _MIN_ROWS_FOR_MULTISTEP:
        # Tiny output: one full-extent block (exempt from the x8 rule).
        tm = rows_packed
        steps = 1
    else:
        # Floor the step count so the fill pipelines under writeback and the
        # grid shards across both TensorCores on v7x.
        steps = max(_MIN_GRID_STEPS, pl.cdiv(rows_packed, max_row_tile))
        tm = min(max_row_tile, _round_up(pl.cdiv(rows_packed, steps), _ROW_ALIGN))
        steps = pl.cdiv(rows_packed, tm)         # ragged last block masked by Pallas

    out_bytes = rows_packed * lane_width * 4

    out_packed = pl.pallas_call(
        _bg_tile_kernel,
        out_shape=jax.ShapeDtypeStruct((rows_packed, lane_width), jnp.float32),
        grid_spec=pltpu.PrefetchScalarGridSpec(
            num_scalar_prefetch=0,
            grid=(steps,),
            # Constant index_map -> pattern DMA'd once, stays resident in VMEM.
            in_specs=[pl.BlockSpec((1, lane_width), lambda i: (0, 0))],
            out_specs=pl.BlockSpec((tm, lane_width), lambda i: (i, 0)),
        ),
        compiler_params=pltpu.CompilerParams(
            dimension_semantics=("parallel",),   # megacore sharding on v7x
            vmem_limit_bytes=_VMEM_LIMIT_BYTES,  # valid on v5e/v6e/v7x
        ),
        # Pure HBM writeback: help XLA schedule/overlap the custom call.
        cost_estimate=pl.CostEstimate(
            flops=0,
            transcendentals=0,
            bytes_accessed=out_bytes + lane_width * 4,
        ),
    )(pattern)

    if return_packed:
        # Consumers that can fuse the unpack should take this path to avoid a
        # possible (N, out_dim) relayout copy.
        return out_packed

    # Contiguous reshape back to per-pixel layout.
    flat = out_packed.reshape(rows_packed * _PACK, out_dim)
    if rows_packed * _PACK != n_rows:
        # Only when n_rows is not a multiple of 128 does this slice occur.
        flat = flat[:n_rows]
    return flat.reshape(*lead_shape, out_dim)


if __name__ == "__main__":
    k1, k2 = jax.random.split(jax.random.PRNGKey(0), 2)

    out_dim = 3
    bg_color = make_bg_color(out_dim=out_dim, bg_color="1.0,1.0,1.0", min_color=-1)

    # Small input consistent with the module: arbitrary leading dims + trailing
    # feature dim (ignored by forward except for its rank).  128 pixels ->
    # 1 packed row -> single-step grid path.
    x = jax.random.normal(k1, (2, 4, 16, 16), dtype=jnp.float32)
    out = jax.block_until_ready(background_field_forward(x, bg_color))
    ref = jnp.broadcast_to(bg_color, x.shape[:-1] + (out_dim,))
    assert out.shape == (2, 4, 16, out_dim), out.shape
    assert jnp.allclose(out, ref), "mismatch vs reference broadcast (small input)"

    # Second (still small) input exercising the multi-step pipelined / megacore
    # grid and the ragged-tail path: 40,000 pixels -> 313 packed rows ->
    # 4 grid steps of 80 rows, masked ragged last block, wrapper slice.
    x2 = jax.random.normal(k2, (4, 100, 100, 4), dtype=jnp.float32)
    out2 = jax.block_until_ready(background_field_forward(x2, bg_color))
    ref2 = jnp.broadcast_to(bg_color, x2.shape[:-1] + (out_dim,))
    assert out2.shape == (4, 100, 100, out_dim), out2.shape
    assert jnp.allclose(out2, ref2), "mismatch vs reference broadcast (multi-step input)"

    print("KERNEL_OK")
</pallas_src>

<mosaic_0001>
module attributes {stable_mosaic.version = 11 : i64} {
  func.func @_bg_tile_kernel(%arg0: i32, %arg1: memref<1x384xf32, #tpu.memory_space<vmem>>, %arg2: memref<1x384xf32, #tpu.memory_space<vmem>>) attributes {dimension_semantics = [#tpu.dimension_semantics<parallel>], iteration_bounds = array<i64: 1>, scalar_prefetch = 0 : i64, scratch_operands = 0 : i64, tpu.core_type = #tpu.core_type<tc>, window_params = [{pipeline_mode = #tpu.pipeline_mode<synchronous>, transform_indices = @transform_0, window_bounds = array<i64: 1, 384>}, {transform_indices = @transform_1, window_bounds = array<i64: 1, 384>}]} {
    %c0 = arith.constant 0 : index
    %c0_0 = arith.constant 0 : index
    %0 = vector.load %arg1[%c0, %c0_0] : memref<1x384xf32, #tpu.memory_space<vmem>>, vector<1x384xf32>
    %c0_1 = arith.constant 0 : index
    %c0_2 = arith.constant 0 : index
    %1 = vector.load %arg2[%c0_1, %c0_2] : memref<1x384xf32, #tpu.memory_space<vmem>>, vector<1x384xf32>
    tpu.vector_store %arg2[%c0_1, %c0_2], %0 {strides = array<i32>} : memref<1x384xf32, #tpu.memory_space<vmem>>, vector<1x384xf32>,
    return
  }
  func.func @transform_0(%arg0: i32) -> (i32, i32) {
    %c0_i32 = arith.constant 0 : i32
    %c0_i32_0 = arith.constant 0 : i32
    %c0_i32_1 = arith.constant 0 : i32
    return %c0_i32, %c0_i32_0 : i32, i32
  }
  func.func @transform_1(%arg0: i32) -> (i32, i32) {
    %c0_i32 = arith.constant 0 : i32
    %c0_i32_0 = arith.constant 0 : i32
    return %arg0, %c0_i32 : i32, i32
  }
}

</mosaic_0001>

<llo_original>
// kernel: tpu_custom_call.1
$region0: #{tpu_custom_call.1}
  #allocation0 [shape = 'u32[]', space=smem, size = 0x4, offset = 0x4, fixed_abs, tag = 'smem constant byte address 0x4 - core index']
  #allocation1 [shape = 'u32[144,128]{1,0:T(1,128)}', space=vmem, size = 0x12000, scoped, tag = 'internal scratch']
  %s0 = inlined_call_operand.hbm [shape: f32[1,384], index: 0, kind: input, shape index: {}]
  %s1 = inlined_call_operand.hbm [shape: f32[1,384], index: 1, kind: output, shape index: {}]
  %s2 = sld [smem:[#allocation0]]
  $region18: #{tpu_custom_call.1} parent=0
    _
  %s4 = ssub.s32 1, %s2
  %s5 = scalar_select 0, %s4, %s2
  $region1: #{tpu_custom_call.1} parent=0
    #allocation2 [shape = 'u8[1536]{0}', space=vmem, size = 0x800, scoped, tag = 'input window, operand 0, single buffered']
    #allocation3 [shape = 's32[1]{0}', space=sflag, size = 0x4, scoped, tag = 'scoped memory for tpu_custom_call.1']
    #allocation4 [shape = 's32[1]{0}', space=sflag, size = 0x4, scoped, tag = 'scoped memory for tpu_custom_call.1']
    #allocation5 [shape = 'u8[1536]{0}', space=vmem, size = 0x800, scoped, tag = 'output window, operand 0, single buffered']
    %6 = vsyncpa [#allocation3], 0
    %7 = vsyncpa [#allocation4], 0
    // Predicated region
    $region2: #{tpu_custom_call.1} parent=1 // pred_check
      _
    $region3: #{tpu_custom_call.1} parent=1 // pred_check_branch
      %9 = sbr.rel (0) target = $region5
    $region4: #{tpu_custom_call.1} parent=1 // pred_region
      %s11 = ssub.s32 48, 48
      %12 = vsyncadd [#allocation3], %s11
      %s14 = sshll.u32 [#allocation2], 4
      %s15 = int_to_ptr.vmem [resolvable:$true] %s14
      %17 = dma.hbm_to_vmem [thread:$0]  %s0, 48, %s15, [#allocation3]
    $region5: #{tpu_custom_call.1} parent=1 // pred_fallthru
      _
    // Predicated region
    $region6: #{tpu_custom_call.1} parent=1 // pred_check
      _
    $region7: #{tpu_custom_call.1} parent=1 // pred_check_branch
      %19 = sbr.rel (0) target = $region9
    $region8: #{tpu_custom_call.1} parent=1 // pred_region
      %20 = dma.done [#allocation3], 48
    $region9: #{tpu_custom_call.1} parent=1 // pred_fallthru
      _
    %v21 = vld [vmem:[#allocation2] sm:$0x7]
    %v22 = vlaneseq
    %vm23 = vcmp.ge.s32.totalorder %v22, 0
    %vm24 = vcmp.lt.s32.totalorder %v22, 384
    %vm25 = vmand %vm23, %vm24
    %26 = vst.msk [vmem:[#allocation5] sm:$0x7] %vm25, %v21
    // Predicated region
    $region10: #{tpu_custom_call.1} parent=1 // pred_check
      _
    $region11: #{tpu_custom_call.1} parent=1 // pred_check_branch
      %28 = sbr.rel (0) target = $region13
    $region12: #{tpu_custom_call.1} parent=1 // pred_region
      %s30 = ssub.s32 48, 48
      %31 = vsyncadd [#allocation4], %s30
      %s33 = sshll.u32 [#allocation5], 4
      %s34 = int_to_ptr.vmem [resolvable:$true] %s33
      %36 = dma.vmem_to_hbm [thread:$0]  %s34, 48, %s1, [#allocation4]
    $region13: #{tpu_custom_call.1} parent=1 // pred_fallthru
      _
    // Predicated region
    $region14: #{tpu_custom_call.1} parent=1 // pred_check
      _
    $region15: #{tpu_custom_call.1} parent=1 // pred_check_branch
      %38 = sbr.rel (0) target = $region17
    $region16: #{tpu_custom_call.1} parent=1 // pred_region
      %39 = dma.done [#allocation4], 48
    $region17: #{tpu_custom_call.1} parent=1 // pred_fallthru
      _
    %40 = vsyncpa [#allocation3], 1
    %41 = vsyncpa [#allocation4], 1

</llo_original>
